<compile_context>
chip_gen: v5e
topology: v5e:2x2
jax: 0.10.0
libtpu: 0.0.40
codegen_flags: <defaults>
</compile_context>

<pallas_src>
import functools

import jax
import jax.numpy as jnp
from jax.experimental import pallas as pl
from jax.experimental.pallas import tpu as pltpu

LANE = 128
SUBLANE = 8
GAMMA = 2.0   # hard-coded below as explicit multiplies
ALPHA = 0.25


def _focal_loss_kernel(x_ref, t_ref, o_ref, *,
                       tile_rows, tiles_per_split, last_tile, valid_in_last):
    c = pl.program_id(0)            # split (TensorCore) index   -- "parallel"
    i = pl.program_id(1)            # tile index within split    -- "arbitrary"
    t = c * tiles_per_split + i     # global data-tile index

    @pl.when(i == 0)
    def _init():
        o_ref[...] = jnp.zeros_like(o_ref)

    pt = x_ref[...].astype(jnp.float32)
    tgt = t_ref[...].astype(jnp.float32)
    one_m_pt = 1.0 - pt
    # gamma == 2: (1-pt)**2 and pt**2 as multiplies -> no exp/log pow lowering.
    # (Two logs kept so soft / non-binary targets stay correct, as in the module.)
    loss = (-ALPHA) * (one_m_pt * one_m_pt) * tgt * jnp.log(pt) \
           - (1.0 - ALPHA) * (pt * pt) * (1.0 - tgt) * jnp.log(one_m_pt)

    sub_groups = tile_rows // SUBLANE

    # Full tiles: no mask, straight vreg-wise accumulation into the resident block.
    @pl.when(t < last_tile)
    def _full_tile():
        o_ref[...] += loss.reshape(sub_groups, SUBLANE, LANE).sum(axis=0)

    # Final data tile: mask padding with a select (NaN/inf garbage cannot leak).
    @pl.when(t == last_tile)
    def _partial_tile():
        row_ids = jax.lax.broadcasted_iota(jnp.int32, (tile_rows, LANE), 0)
        col_ids = jax.lax.broadcasted_iota(jnp.int32, (tile_rows, LANE), 1)
        local_idx = row_ids * LANE + col_ids            # local to the tile: no overflow
        masked = jnp.where(local_idx < valid_in_last, loss, 0.0)
        o_ref[...] += masked.reshape(sub_groups, SUBLANE, LANE).sum(axis=0)

    # Tiles with t > last_tile only exist to pad the grid (their block index is
    # clamped in the index_map); they contribute nothing.


def bce_focal_loss(x, target, *, tile_rows=2048, num_splits=2):
    """Mean BCE focal loss (gamma=2, alpha=0.25) computed in a Pallas TPU kernel.

    x, target: same-shape arrays; x holds probabilities in (0, 1).
    Returns a scalar float32 (elementwise mean of the focal loss).
    """
    n = int(x.size)
    xf = x.reshape(-1)
    tf = target.reshape(-1)
    # Keep bf16 inputs narrow through HBM; math is done in f32 inside the kernel.
    if xf.dtype not in (jnp.float32, jnp.bfloat16):
        xf = xf.astype(jnp.float32)
    if tf.dtype not in (jnp.float32, jnp.bfloat16):
        tf = tf.astype(jnp.float32)

    # Pad only if the flat length is not a multiple of 8*128 (so the slab is
    # (rows, 128) with rows % 8 == 0).  Typical NCHW sizes hit the no-copy path.
    row_unit = SUBLANE * LANE
    n_pad = pl.cdiv(n, row_unit) * row_unit
    if n_pad != n:
        xf = jnp.pad(xf, (0, n_pad - n), constant_values=0.5)  # 0.5 keeps log() finite
        tf = jnp.pad(tf, (0, n_pad - n))
    rows = n_pad // LANE

    tile_rows = max(SUBLANE, (int(tile_rows) // SUBLANE) * SUBLANE)
    tile_rows = min(tile_rows, rows)
    chunk = tile_rows * LANE

    num_tiles = pl.cdiv(rows, tile_rows)        # actual data tiles (last may be partial)
    last_tile = num_tiles - 1
    valid_in_last = n - last_tile * chunk       # valid elements in the last tile

    num_splits = max(1, int(num_splits))
    tiles_per_split = pl.cdiv(num_tiles, num_splits)

    x2 = xf.reshape(rows, LANE)
    t2 = tf.reshape(rows, LANE)

    def data_map(c, i):
        # Clamp so grid-padding tiles (t > last_tile) re-read a valid block;
        # the kernel skips their accumulation.
        return (jnp.minimum(c * tiles_per_split + i, last_tile), 0)

    kernel = functools.partial(
        _focal_loss_kernel,
        tile_rows=tile_rows,
        tiles_per_split=tiles_per_split,
        last_tile=last_tile,
        valid_in_last=valid_in_last,
    )

    partial_sums = pl.pallas_call(
        kernel,
        out_shape=jax.ShapeDtypeStruct((num_splits * SUBLANE, LANE), jnp.float32),
        grid_spec=pltpu.PrefetchScalarGridSpec(
            num_scalar_prefetch=0,
            grid=(num_splits, tiles_per_split),
            in_specs=[
                pl.BlockSpec((tile_rows, LANE), data_map),
                pl.BlockSpec((tile_rows, LANE), data_map),
            ],
            # Per-split (8, 128) accumulator block, resident across the i axis.
            out_specs=pl.BlockSpec((SUBLANE, LANE), lambda c, i: (c, 0)),
        ),
        compiler_params=pltpu.CompilerParams(
            dimension_semantics=("parallel", "arbitrary"),
        ),
    )(x2, t2)

    # Single tiny cross-lane reduce + divide outside the hot loop.
    return jnp.sum(partial_sums) / jnp.float32(n)


if __name__ == "__main__":
    key = jax.random.PRNGKey(0)
    k1, k2 = jax.random.split(key)

    # Small NCHW-like shapes, consistent with a segmentation-style binary loss.
    shape = (2, 4, 16, 16)
    # Probabilities strictly inside (0, 1) so log() is finite (matches PyTorch usage).
    x = jax.random.uniform(k1, shape, jnp.float32, minval=0.05, maxval=0.95)
    target = (jax.random.uniform(k2, shape, jnp.float32) > 0.5).astype(jnp.float32)

    loss = bce_focal_loss(x, target)
    loss = jax.block_until_ready(loss)

    # Pure-JAX reference check.
    pt = x
    ref = jnp.mean(
        -ALPHA * (1.0 - pt) ** GAMMA * target * jnp.log(pt)
        - (1.0 - ALPHA) * pt ** GAMMA * (1.0 - target) * jnp.log(1.0 - pt)
    )
    assert jnp.allclose(loss, ref, rtol=1e-5, atol=1e-6), (loss, ref)

    print("KERNEL_OK")
</pallas_src>

<mosaic_0001>
module attributes {stable_mosaic.version = 11 : i64} {
  func.func @_focal_loss_kernel(%arg0: i32, %arg1: i32, %arg2: memref<16x128xf32, #tpu.memory_space<vmem>>, %arg3: memref<16x128xf32, #tpu.memory_space<vmem>>, %arg4: memref<8x128xf32, #tpu.memory_space<vmem>>) attributes {dimension_semantics = [#tpu.dimension_semantics<parallel>, #tpu.dimension_semantics<arbitrary>], iteration_bounds = array<i64: 2, 1>, scalar_prefetch = 0 : i64, scratch_operands = 0 : i64, tpu.core_type = #tpu.core_type<tc>, window_params = [{transform_indices = @transform_0, window_bounds = array<i64: 16, 128>}, {transform_indices = @transform_1, window_bounds = array<i64: 16, 128>}, {transform_indices = @transform_2, window_bounds = array<i64: 8, 128>}]} {
    %c1_i32 = arith.constant 1 : i32
    %0 = arith.muli %arg0, %c1_i32 : i32
    %1 = arith.addi %0, %arg1 : i32
    %c0_i32 = arith.constant 0 : i32
    %2 = arith.cmpi eq, %arg1, %c0_i32 : i32
    %3 = arith.extui %2 : i1 to i32
    %c0_i32_0 = arith.constant 0 : i32
    %4 = arith.cmpi ne, %3, %c0_i32_0 : i32
    scf.if %4 {
      %cst_11 = arith.constant 0.000000e+00 : f32
      %30 = vector.broadcast %cst_11 : f32 to vector<8x128xf32>
      %c0_12 = arith.constant 0 : index
      %c0_13 = arith.constant 0 : index
      %31 = vector.load %arg4[%c0_12, %c0_13] : memref<8x128xf32, #tpu.memory_space<vmem>>, vector<8x128xf32>
      tpu.vector_store %arg4[%c0_12, %c0_13], %30 {strides = array<i32>} : memref<8x128xf32, #tpu.memory_space<vmem>>, vector<8x128xf32>,
    } else {
    }
    %c0 = arith.constant 0 : index
    %c0_1 = arith.constant 0 : index
    %5 = vector.load %arg2[%c0, %c0_1] : memref<16x128xf32, #tpu.memory_space<vmem>>, vector<16x128xf32>
    %c0_2 = arith.constant 0 : index
    %c0_3 = arith.constant 0 : index
    %6 = vector.load %arg3[%c0_2, %c0_3] : memref<16x128xf32, #tpu.memory_space<vmem>>, vector<16x128xf32>
    %cst = arith.constant 1.000000e+00 : f32
    %7 = vector.broadcast %cst : f32 to vector<16x128xf32>
    %8 = arith.subf %7, %5 : vector<16x128xf32>
    %9 = arith.mulf %8, %8 : vector<16x128xf32>
    %cst_4 = arith.constant -2.500000e-01 : f32
    %10 = vector.broadcast %cst_4 : f32 to vector<16x128xf32>
    %11 = arith.mulf %10, %9 : vector<16x128xf32>
    %12 = arith.mulf %11, %6 : vector<16x128xf32>
    %13 = math.log %5 : vector<16x128xf32>
    %14 = arith.mulf %12, %13 : vector<16x128xf32>
    %15 = arith.mulf %5, %5 : vector<16x128xf32>
    %cst_5 = arith.constant 7.500000e-01 : f32
    %16 = vector.broadcast %cst_5 : f32 to vector<16x128xf32>
    %17 = arith.mulf %16, %15 : vector<16x128xf32>
    %cst_6 = arith.constant 1.000000e+00 : f32
    %18 = vector.broadcast %cst_6 : f32 to vector<16x128xf32>
    %19 = arith.subf %18, %6 : vector<16x128xf32>
    %20 = arith.mulf %17, %19 : vector<16x128xf32>
    %21 = math.log %8 : vector<16x128xf32>
    %22 = arith.mulf %20, %21 : vector<16x128xf32>
    %23 = arith.subf %14, %22 : vector<16x128xf32>
    %c0_i32_7 = arith.constant 0 : i32
    %24 = arith.cmpi slt, %1, %c0_i32_7 : i32
    %25 = arith.extui %24 : i1 to i32
    %c0_i32_8 = arith.constant 0 : i32
    %26 = arith.cmpi ne, %25, %c0_i32_8 : i32
    scf.if %26 {
      %c0_11 = arith.constant 0 : index
      %c0_12 = arith.constant 0 : index
      %30 = vector.load %arg4[%c0_11, %c0_12] : memref<8x128xf32, #tpu.memory_space<vmem>>, vector<8x128xf32>
      %31 = vector.shape_cast %23 : vector<16x128xf32> to vector<2x8x128xf32>
      %cst_13 = arith.constant dense<0.000000e+00> : vector<8x128xf32>
      %32 = vector.multi_reduction <add>, %31, %cst_13 [0] : vector<2x8x128xf32> to vector<8x128xf32>
      %33 = arith.addf %30, %32 : vector<8x128xf32>
      %c0_14 = arith.constant 0 : index
      %c0_15 = arith.constant 0 : index
      %34 = vector.load %arg4[%c0_14, %c0_15] : memref<8x128xf32, #tpu.memory_space<vmem>>, vector<8x128xf32>
      tpu.vector_store %arg4[%c0_14, %c0_15], %33 {strides = array<i32>} : memref<8x128xf32, #tpu.memory_space<vmem>>, vector<8x128xf32>,
    } else {
    }
    %c0_i32_9 = arith.constant 0 : i32
    %27 = arith.cmpi eq, %1, %c0_i32_9 : i32
    %28 = arith.extui %27 : i1 to i32
    %c0_i32_10 = arith.constant 0 : i32
    %29 = arith.cmpi ne, %28, %c0_i32_10 : i32
    scf.if %29 {
      %30 = tpu.iota {dimensions = array<i32: 0>} : vector<16x128xi32>
      %31 = tpu.iota {dimensions = array<i32: 1>} : vector<16x128xi32>
      %c128_i32 = arith.constant 128 : i32
      %32 = vector.broadcast %c128_i32 : i32 to vector<16x128xi32>
      %33 = arith.muli %30, %32 : vector<16x128xi32>
      %34 = arith.addi %33, %31 : vector<16x128xi32>
      %c2048_i32 = arith.constant 2048 : i32
      %35 = vector.broadcast %c2048_i32 : i32 to vector<16x128xi32>
      %36 = arith.cmpi slt, %34, %35 : vector<16x128xi32>
      %cst_11 = arith.constant 0.000000e+00 : f32
      %37 = vector.broadcast %cst_11 : f32 to vector<16x128xf32>
      %38 = arith.select %36, %23, %37 : vector<16x128xi1>, vector<16x128xf32>
      %c0_12 = arith.constant 0 : index
      %c0_13 = arith.constant 0 : index
      %39 = vector.load %arg4[%c0_12, %c0_13] : memref<8x128xf32, #tpu.memory_space<vmem>>, vector<8x128xf32>
      %40 = vector.shape_cast %38 : vector<16x128xf32> to vector<2x8x128xf32>
      %cst_14 = arith.constant dense<0.000000e+00> : vector<8x128xf32>
      %41 = vector.multi_reduction <add>, %40, %cst_14 [0] : vector<2x8x128xf32> to vector<8x128xf32>
      %42 = arith.addf %39, %41 : vector<8x128xf32>
      %c0_15 = arith.constant 0 : index
      %c0_16 = arith.constant 0 : index
      %43 = vector.load %arg4[%c0_15, %c0_16] : memref<8x128xf32, #tpu.memory_space<vmem>>, vector<8x128xf32>
      tpu.vector_store %arg4[%c0_15, %c0_16], %42 {strides = array<i32>} : memref<8x128xf32, #tpu.memory_space<vmem>>, vector<8x128xf32>,
    } else {
    }
    return
  }
  func.func @transform_0(%arg0: i32, %arg1: i32) -> (i32, i32) {
    %c1_i32 = arith.constant 1 : i32
    %0 = arith.muli %arg0, %c1_i32 : i32
    %1 = arith.addi %0, %arg1 : i32
    %c0_i32 = arith.constant 0 : i32
    %2 = arith.minsi %1, %c0_i32 : i32
    %c0_i32_0 = arith.constant 0 : i32
    %c0_i32_1 = arith.constant 0 : i32
    return %2, %c0_i32_0 : i32, i32
  }
  func.func @transform_1(%arg0: i32, %arg1: i32) -> (i32, i32) {
    %c1_i32 = arith.constant 1 : i32
    %0 = arith.muli %arg0, %c1_i32 : i32
    %1 = arith.addi %0, %arg1 : i32
    %c0_i32 = arith.constant 0 : i32
    %2 = arith.minsi %1, %c0_i32 : i32
    %c0_i32_0 = arith.constant 0 : i32
    %c0_i32_1 = arith.constant 0 : i32
    return %2, %c0_i32_0 : i32, i32
  }
  func.func @transform_2(%arg0: i32, %arg1: i32) -> (i32, i32) {
    %c0_i32 = arith.constant 0 : i32
    %c0_i32_0 = arith.constant 0 : i32
    return %arg0, %c0_i32 : i32, i32
  }
}

</mosaic_0001>

<llo_original>
// kernel: tpu_custom_call.1
$region0: #{tpu_custom_call.1}
  #allocation0 [shape = 'u32[]', space=smem, size = 0x4, offset = 0x4, fixed_abs, tag = 'smem constant byte address 0x4 - core index']
  #allocation1 [shape = 'u32[72,128]{1,0:T(1,128)}', space=vmem, size = 0x9000, scoped, tag = 'internal scratch']
  %s0 = inlined_call_operand.hbm [shape: f32[16,128], index: 0, kind: input, shape index: {}]
  %s1 = inlined_call_operand.hbm [shape: f32[16,128], index: 1, kind: input, shape index: {}]
  %s2 = inlined_call_operand.hbm [shape: f32[16,128], index: 2, kind: output, shape index: {}]
  %s3 = sld [smem:[#allocation0]]
  $region61: #{tpu_custom_call.1} parent=0
    _
  %s5 = ssub.s32 1, %s3
  %s6 = scalar_select 0, %s5, %s3
  $region1: #{tpu_custom_call.1} parent=0
    #allocation2 [shape = 'u8[16384]{0}', space=vmem, size = 0x4000, scoped, tag = 'input window, operand 0']
    #allocation3 [shape = 's32[2]{0}', space=sflag, size = 0x8, scoped, tag = 'scoped memory for tpu_custom_call.1']
    #allocation4 [shape = 's32[2]{0}', space=sflag, size = 0x8, scoped, tag = 'scoped memory for tpu_custom_call.1']
    #allocation5 [shape = 'u8[16384]{0}', space=vmem, size = 0x4000, scoped, tag = 'input window, operand 1']
    #allocation6 [shape = 's32[2]{0}', space=sflag, size = 0x8, scoped, tag = 'scoped memory for tpu_custom_call.1']
    #allocation7 [shape = 'u8[8192]{0}', space=vmem, size = 0x2000, scoped, tag = 'output window, operand 0']
    %7 = vsyncpa [#allocation3], 0
    %s8 = scalar_lea.sflag [#allocation3], 1
    %9 = vsyncpa %s8, 0
    %10 = vsyncpa [#allocation6], 0
    %s11 = scalar_lea.sflag [#allocation6], 1
    %12 = vsyncpa %s11, 0
    %13 = vsyncpa [#allocation4], 0
    %s14 = scalar_lea.sflag [#allocation4], 1
    %15 = vsyncpa %s14, 0
    loop: start=0, step=1, limit=4
    $region2: #{tpu_custom_call.1} parent=1 // loop_pre_header
      _
    $region3: #{tpu_custom_call.1} parent=1 // loop_header
      %s17 = sphi 0, %s21
      %p18 = scmp.ge.s32.totalorder %s17, 4
      %s24 = sphi 0, %s36
      %s25 = sphi 0, %s32
      %s26 = sphi 0, %s24
      %s27 = sphi 0, %s25
      %s28 = sphi 0, %s26
      %s29 = sphi 0, %s27
      %s45 = sphi 0, %s47
      %s48 = sphi 0, %s45
      %s49 = sphi 0, %s48
      %s65 = sphi 0, %s49
      %s77 = sphi 0, %s79
      %s80 = sphi 0, %s77
      %s81 = sphi 0, %s80
      %s97 = sphi 0, %s81
      %s103 = sphi 0, %s105
      %s106 = sphi 0, %s103
      %s107 = sphi 0, %s106
      %s123 = sphi 0, %s107
    $region4: #{tpu_custom_call.1} parent=1 // loop_header_branch
      %20 = sbr.rel (%p18) target = $region8
    $region5: #{tpu_custom_call.1} parent=1 // loop_body
      %s22 = ssub.s32 %s17, 1
      %s23 = ssub.s32 %s17, 2
      %s30 = sadd.s32 1, %s25
      %p31 = scmp.ge.s32.totalorder %s30, 1
      %s32 = scalar_select %p31, 0, %s30
      %s33 = sadd.s32 1, %s24
      %s34 = scalar_select %p31, %s33, %s24
      %p35 = scmp.ge.s32.totalorder %s34, 2
      %s36 = scalar_select %p35, 0, %s34
      %s37 = sadd.s32 %s24, %s25
      %p38 = scmp.lt.s32.totalorder %s37, 0
      %s39 = scalar_select %p38, %s37, 0
      %s40 = sadd.s32 %s36, %s32
      %p41 = scmp.lt.s32.totalorder %s40, 0
      %s42 = scalar_select %p41, %s40, 0
      %s43 = ssub.s32 %s39, %s42
      %p44 = scmp.eq.s32.totalorder %s43, 0
      %s46 = sadd.s32 %s45, 1
      %s47 = scalar_select %p44, %s45, %s46
      %p50 = pneg %p44
      %p51 = scmp.eq.s32.totalorder %s17, 1
      %p52 = por %p50, %p51
      %p53 = scmp.ne.s32.totalorder %s45, %s48
      %p54 = scmp.eq.s32.totalorder %s17, 0
      %p55 = por %p53, %p54
      %p56 = scmp.ne.s32.totalorder %s45, %s48
      %p57 = scmp.eq.s32.totalorder %s22, 1
      %p58 = por %p56, %p57
      %p59 = scmp.ne.s32.totalorder %s48, %s49
      %p60 = scmp.eq.s32.totalorder %s22, 0
      %p61 = por %p59, %p60
      %p62 = scmp.ne.s32.totalorder %s48, %s49
      %p63 = scmp.eq.s32.totalorder %s23, 1
      %p64 = por %p62, %p63
      %p66 = scmp.ne.s32.totalorder %s49, %s65
      %p67 = scmp.eq.s32.totalorder %s23, 0
      %p68 = por %p66, %p67
      %s69 = sadd.s32 %s24, %s25
      %p70 = scmp.lt.s32.totalorder %s69, 0
      %s71 = scalar_select %p70, %s69, 0
      %s72 = sadd.s32 %s36, %s32
      %p73 = scmp.lt.s32.totalorder %s72, 0
      %s74 = scalar_select %p73, %s72, 0
      %s75 = ssub.s32 %s71, %s74
      %p76 = scmp.eq.s32.totalorder %s75, 0
      %s78 = sadd.s32 %s77, 1
      %s79 = scalar_select %p76, %s77, %s78
      %p82 = pneg %p76
      %p83 = scmp.eq.s32.totalorder %s17, 1
      %p84 = por %p82, %p83
      %p85 = scmp.ne.s32.totalorder %s77, %s80
      %p86 = scmp.eq.s32.totalorder %s17, 0
      %p87 = por %p85, %p86
      %p88 = scmp.ne.s32.totalorder %s77, %s80
      %p89 = scmp.eq.s32.totalorder %s22, 1
      %p90 = por %p88, %p89
      %p91 = scmp.ne.s32.totalorder %s80, %s81
      %p92 = scmp.eq.s32.totalorder %s22, 0
      %p93 = por %p91, %p92
      %p94 = scmp.ne.s32.totalorder %s80, %s81
      %p95 = scmp.eq.s32.totalorder %s23, 1
      %p96 = por %p94, %p95
      %p98 = scmp.ne.s32.totalorder %s81, %s97
      %p99 = scmp.eq.s32.totalorder %s23, 0
      %p100 = por %p98, %p99
      %s101 = ssub.s32 %s24, %s36
      %p102 = scmp.eq.s32.totalorder %s101, 0
      %s104 = sadd.s32 %s103, 1
      %s105 = scalar_select %p102, %s103, %s104
      %p108 = pneg %p102
      %p109 = scmp.eq.s32.totalorder %s17, 1
      %p110 = por %p108, %p109
      %p111 = scmp.ne.s32.totalorder %s103, %s106
      %p112 = scmp.eq.s32.totalorder %s17, 0
      %p113 = por %p111, %p112
      %p114 = scmp.ne.s32.totalorder %s103, %s106
      %p115 = scmp.eq.s32.totalorder %s22, 1
      %p116 = por %p114, %p115
      %p117 = scmp.ne.s32.totalorder %s106, %s107
      %p118 = scmp.eq.s32.totalorder %s22, 0
      %p119 = por %p117, %p118
      %p120 = scmp.ne.s32.totalorder %s106, %s107
      %p121 = scmp.eq.s32.totalorder %s23, 1
      %p122 = por %p120, %p121
      %p124 = scmp.ne.s32.totalorder %s107, %s123
      %p125 = scmp.eq.s32.totalorder %s23, 0
      %p126 = por %p124, %p125
      %p127 = scmp.le.s32.totalorder 1, %s17
      %p128 = scmp.lt.s32.totalorder %s17, 3
      %p129 = pnand %p127, %p128
      %p130 = pneg %p129
      // Predicated region
      $region9: #{tpu_custom_call.1} parent=5 // pred_check
        _
      $region10: #{tpu_custom_call.1} parent=5 // pred_check_branch
        %132 = sbr.rel (%p129) target = $region12
      $region11: #{tpu_custom_call.1} parent=5 // pred_region
        %s133 = ssub.s32 %s17, 1
      $region12: #{tpu_custom_call.1} parent=5 // pred_fallthru
        _
      %p134 = scmp.lt.s32.totalorder %s17, 2
      // Predicated region
      $region13: #{tpu_custom_call.1} parent=5 // pred_check
        %p135 = pneg %p134
      $region14: #{tpu_custom_call.1} parent=5 // pred_check_branch
        %137 = sbr.rel (%p135) target = $region16
      $region15: #{tpu_custom_call.1} parent=5 // pred_region
        // Predicated region
        $region17: #{tpu_custom_call.1} parent=15 // pred_check
          %p138 = pneg %p55
        $region18: #{tpu_custom_call.1} parent=15 // pred_check_branch
          %140 = sbr.rel (%p138) target = $region20
        $region19: #{tpu_custom_call.1} parent=15 // pred_region
          %s141 = sand.u32 %s45, 1
          %s142 = scalar_lea.sflag [#allocation3], %s141
          %s143 = sand.u32 %s45, 1
          %s144 = smul.addr %s143, 16
          %s145 = scalar_lea.vmem [#allocation2], %s144
          %s146 = sadd.s32 %s24, %s25
          %p147 = scmp.lt.s32.totalorder %s146, 0
          %s148 = scalar_select %p147, %s146, 0
          %s149 = smul.u32 2, %s148
          %151 = vsyncadd %s142, 0
          %s152 = smul.addr %s149, 8
          %s153 = scalar_lea.hbm %s0, %s152
          %s154 = sshll.u32 %s153, 4
          %s155 = int_to_ptr.hbm [resolvable:$true] %s154
          %s156 = sshll.u32 %s145, 4
          %s157 = int_to_ptr.vmem [resolvable:$true] %s156
          %162 = dma.hbm_to_vmem [thread:$0]  %s155, 256, %s157, %s142, 128, 128, 8
        $region20: #{tpu_custom_call.1} parent=15 // pred_fallthru
          _
        // Predicated region
        $region21: #{tpu_custom_call.1} parent=15 // pred_check
          %p163 = pneg %p87
        $region22: #{tpu_custom_call.1} parent=15 // pred_check_branch
          %165 = sbr.rel (%p163) target = $region24
        $region23: #{tpu_custom_call.1} parent=15 // pred_region
          %s166 = sand.u32 %s77, 1
          %s167 = scalar_lea.sflag [#allocation6], %s166
          %s168 = sand.u32 %s77, 1
          %s169 = smul.addr %s168, 16
          %s170 = scalar_lea.vmem [#allocation5], %s169
          %s171 = sadd.s32 %s24, %s25
          %p172 = scmp.lt.s32.totalorder %s171, 0
          %s173 = scalar_select %p172, %s171, 0
          %s174 = smul.u32 2, %s173
          %176 = vsyncadd %s167, 0
          %s177 = smul.addr %s174, 8
          %s178 = scalar_lea.hbm %s1, %s177
          %s179 = sshll.u32 %s178, 4
          %s180 = int_to_ptr.hbm [resolvable:$true] %s179
          %s181 = sshll.u32 %s170, 4
          %s182 = int_to_ptr.vmem [resolvable:$true] %s181
          %187 = dma.hbm_to_vmem [thread:$0]  %s180, 256, %s182, %s167, 128, 128, 8
        $region24: #{tpu_custom_call.1} parent=15 // pred_fallthru
          _
      $region16: #{tpu_custom_call.1} parent=5 // pred_fallthru
        _
      %p188 = scmp.le.s32.totalorder 1, %s17
      %p189 = scmp.lt.s32.totalorder %s17, 3
      %p190 = pnand %p188, %p189
      %p191 = pneg %p190
      // Predicated region
      $region25: #{tpu_custom_call.1} parent=5 // pred_check
        _
      $region26: #{tpu_custom_call.1} parent=5 // pred_check_branch
        %193 = sbr.rel (%p190) target = $region28
      $region27: #{tpu_custom_call.1} parent=5 // pred_region
        %s194 = ssub.s32 %s17, 1
        %s195 = sand.u32 %s48, 1
        %s196 = scalar_lea.sflag [#allocation3], %s195
        %s197 = sand.u32 %s48, 1
        %s198 = smul.addr %s197, 16
        %s199 = scalar_lea.vmem [#allocation2], %s198
        // Predicated region
        $region29: #{tpu_custom_call.1} parent=27 // pred_check
          %p200 = pneg %p61
        $region30: #{tpu_custom_call.1} parent=27 // pred_check_branch
          %202 = sbr.rel (%p200) target = $region32
        $region31: #{tpu_custom_call.1} parent=27 // pred_region
          %204 = dma.done %s196, 256
        $region32: #{tpu_custom_call.1} parent=27 // pred_fallthru
          _
        %s205 = sand.u32 %s80, 1
        %s206 = scalar_lea.sflag [#allocation6], %s205
        %s207 = sand.u32 %s80, 1
        %s208 = smul.addr %s207, 16
        %s209 = scalar_lea.vmem [#allocation5], %s208
        // Predicated region
        $region33: #{tpu_custom_call.1} parent=27 // pred_check
          %p210 = pneg %p93
        $region34: #{tpu_custom_call.1} parent=27 // pred_check_branch
          %212 = sbr.rel (%p210) target = $region36
        $region35: #{tpu_custom_call.1} parent=27 // pred_region
          %214 = dma.done %s206, 256
        $region36: #{tpu_custom_call.1} parent=27 // pred_fallthru
          _
        %s215 = sand.u32 %s48, 1
        %s216 = scalar_lea.sflag [#allocation3], %s215
        %s217 = sand.u32 %s48, 1
        %s218 = smul.addr %s217, 16
        %s219 = scalar_lea.vmem [#allocation2], %s218
        %p220 = pneg %p61
        %p221 = pneg %p58
        %s222 = sand.u32 %s80, 1
        %s223 = scalar_lea.sflag [#allocation6], %s222
        %s224 = sand.u32 %s80, 1
        %s225 = smul.addr %s224, 16
        %s226 = scalar_lea.vmem [#allocation5], %s225
        %p227 = pneg %p93
        %p228 = pneg %p90
        %p229 = pneg %p119
        %p230 = pneg %p116
        %s231 = sand.u32 %s106, 1
        %s232 = scalar_lea.sflag [#allocation4], %s231
        %s233 = sand.u32 %s106, 1
        %s234 = smul.addr %s233, 8
        %s235 = scalar_lea.vmem [#allocation7], %s234
        %s236 = sadd.s32 %s26, %s27
        %p237 = scmp.lt.s32.totalorder %s236, 0
        %s238 = scalar_select %p237, %s236, 0
        %s239 = smul.u32 2, %s238
        %s240 = sadd.s32 %s26, %s27
        %p241 = scmp.lt.s32.totalorder %s240, 0
        %s242 = scalar_select %p241, %s240, 0
        %s243 = smul.u32 2, %s242
        %s244 = sadd.s32 %s26, %s27
        %p245 = scmp.eq.s32.totalorder %s27, 0
        // Predicated region
        $region37: #{tpu_custom_call.1} parent=27 // pred_check
          %p246 = pneg %p245
        $region38: #{tpu_custom_call.1} parent=27 // pred_check_branch
          %248 = sbr.rel (%p246) target = $region40
        $region39: #{tpu_custom_call.1} parent=27 // pred_region
          %249 = vst [vmem:[%s235] sm:$0xff] 0.0
        $region40: #{tpu_custom_call.1} parent=27 // pred_fallthru
          _
        %v250 = vld [vmem:[%s199] sm:$0xff]
        %v251 = vld [vmem:[%s199 + $0x8] sm:$0xff]
        %v252 = vld [vmem:[%s209] sm:$0xff]
        %v253 = vld [vmem:[%s209 + $0x8] sm:$0xff]
        %v254 = vsub.f32 1.0, %v250
        %v255 = vsub.f32 1.0, %v251
        %v256 = vmul.f32 %v254, %v254
        %v257 = vmul.f32 %v255, %v255
        %v258 = vmul.f32 %v256, -0.25
        %v259 = vmul.f32 %v257, -0.25
        %v260 = vmul.f32 %v258, %v252
        %v261 = vmul.f32 %v259, %v253
        %v262 = vlog2.pop %v250
        %v263 = vmul.f32 %v262, 0.6931472
        %v264 = vlog2.pop %v251
        %v265 = vmul.f32 %v264, 0.6931472
        %v266 = vmul.f32 %v260, %v263
        %v267 = vmul.f32 %v261, %v265
        %v268 = vmul.f32 %v250, %v250
        %v269 = vmul.f32 %v251, %v251
        %v270 = vmul.f32 %v268, 0.75
        %v271 = vmul.f32 %v269, 0.75
        %v272 = vsub.f32 1.0, %v252
        %v273 = vsub.f32 1.0, %v253
        %v274 = vmul.f32 %v270, %v272
        %v275 = vmul.f32 %v271, %v273
        %v276 = vlog2.pop %v254
        %v277 = vmul.f32 %v276, 0.6931472
        %v278 = vlog2.pop %v255
        %v279 = vmul.f32 %v278, 0.6931472
        %v280 = vmul.f32 %v274, %v277
        %v281 = vmul.f32 %v275, %v279
        %v282 = vsub.f32 %v266, %v280
        %v283 = vsub.f32 %v267, %v281
        %p284 = scmp.lt.s32.totalorder %s244, 0
        // Predicated region
        $region41: #{tpu_custom_call.1} parent=27 // pred_check
          %p285 = pneg %p284
        $region42: #{tpu_custom_call.1} parent=27 // pred_check_branch
          %287 = sbr.rel (%p285) target = $region44
        $region43: #{tpu_custom_call.1} parent=27 // pred_region
          %v288 = vld [vmem:[%s235] sm:$0xff]
          %v289 = vadd.f32 %v282, %v283
          %v290 = vadd.f32 %v288, %v289
          %291 = vst [vmem:[%s235] sm:$0xff] %v290
        $region44: #{tpu_custom_call.1} parent=27 // pred_fallthru
          _
        %p292 = scmp.eq.s32.totalorder %s244, 0
        // Predicated region
        $region45: #{tpu_custom_call.1} parent=27 // pred_check
          %p293 = pneg %p292
        $region46: #{tpu_custom_call.1} parent=27 // pred_check_branch
          %295 = sbr.rel (%p293) target = $region48
        $region47: #{tpu_custom_call.1} parent=27 // pred_region
          %v296 = vlaneseq
          %v297 = vshrl.u32 %v296, 7
          %v298 = vadd.s32 %v297, 8
          %v299 = vlaneseq
          %v300 = vand.u32 %v299, 127
          %v301 = vmul.u32 %v297, 128
          %v302 = vmul.u32 %v298, 128
          %v303 = vadd.s32 %v301, %v300
          %v304 = vadd.s32 %v302, %v300
          %vm305 = vcmp.lt.s32.totalorder %v303, 2048
          %vm306 = vcmp.lt.s32.totalorder %v304, 2048
          %v307 = vsel %vm305, %v282, 0.0
          %v308 = vsel %vm306, %v283, 0.0
          %v309 = vld [vmem:[%s235] sm:$0xff]
          %v310 = vadd.f32 %v307, %v308
          %v311 = vadd.f32 %v309, %v310
          %312 = vst [vmem:[%s235] sm:$0xff] %v311
        $region48: #{tpu_custom_call.1} parent=27 // pred_fallthru
          _
        %s313 = sand.u32 %s106, 1
        %s314 = scalar_lea.sflag [#allocation4], %s313
        %s315 = sand.u32 %s106, 1
        %s316 = smul.addr %s315, 8
        %s317 = scalar_lea.vmem [#allocation7], %s316
        // Predicated region
        $region49: #{tpu_custom_call.1} parent=27 // pred_check
          %p318 = pneg %p116
        $region50: #{tpu_custom_call.1} parent=27 // pred_check_branch
          %320 = sbr.rel (%p318) target = $region52
        $region51: #{tpu_custom_call.1} parent=27 // pred_region
          %322 = vsyncadd %s314, 0
          %s323 = smul.addr %s26, 8
          %s324 = scalar_lea.hbm %s2, %s323
          %s326 = sshll.u32 %s317, 4
          %s327 = int_to_ptr.vmem [resolvable:$true] %s326
          %s328 = sshll.u32 %s324, 4
          %s329 = int_to_ptr.hbm [resolvable:$true] %s328
          %331 = dma.vmem_to_hbm [thread:$0]  %s327, 128, %s329, %s314
        $region52: #{tpu_custom_call.1} parent=27 // pred_fallthru
          _
      $region28: #{tpu_custom_call.1} parent=5 // pred_fallthru
        _
      %p332 = scmp.le.s32.totalorder 2, %s17
      // Predicated region
      $region53: #{tpu_custom_call.1} parent=5 // pred_check
        %p333 = pneg %p332
      $region54: #{tpu_custom_call.1} parent=5 // pred_check_branch
        %335 = sbr.rel (%p333) target = $region56
      $region55: #{tpu_custom_call.1} parent=5 // pred_region
        %s336 = ssub.s32 %s17, 2
        // Predicated region
        $region57: #{tpu_custom_call.1} parent=55 // pred_check
          %p337 = pneg %p122
        $region58: #{tpu_custom_call.1} parent=55 // pred_check_branch
          %339 = sbr.rel (%p337) target = $region60
        $region59: #{tpu_custom_call.1} parent=55 // pred_region
          %s340 = sand.u32 %s107, 1
          %s341 = scalar_lea.sflag [#allocation4], %s340
          %s342 = sand.u32 %s107, 1
          %s343 = smul.addr %s342, 8
          %s344 = scalar_lea.vmem [#allocation7], %s343
          %346 = dma.done %s341, 128
        $region60: #{tpu_custom_call.1} parent=55 // pred_fallthru
          _
      $region56: #{tpu_custom_call.1} parent=5 // pred_fallthru
        _
    $region6: #{tpu_custom_call.1} parent=1 // loop_footer
      %s21 = sadd.s32 1, %s17
    $region7: #{tpu_custom_call.1} parent=1 // loop_footer_branch
      %16 = sbr.rel target = $region3
    $region8: #{tpu_custom_call.1} parent=1 // loop_exit
      _
    %347 = vsyncpa [#allocation3], 1
    %s348 = scalar_lea.sflag [#allocation3], 1
    %349 = vsyncpa %s348, 1
    %350 = vsyncpa [#allocation6], 1
    %s351 = scalar_lea.sflag [#allocation6], 1
    %352 = vsyncpa %s351, 1
    %353 = vsyncpa [#allocation4], 1
    %s354 = scalar_lea.sflag [#allocation4], 1
    %355 = vsyncpa %s354, 1

</llo_original>
